<compile_context>
chip_gen: v7x
topology: tpu7x:2x2x1
jax: 0.10.0
libtpu: 0.0.40
codegen_flags: <defaults>
</compile_context>

<pallas_src>
import functools

import jax
import jax.numpy as jnp
from jax.experimental import pallas as pl
from jax.experimental.pallas import tpu as pltpu


def _gated_fusion_kernel(x_ref, y_ref,
                         wg_x_ref, wg_y_ref, bg_ref,
                         wc_fg_ref, wc_pg_ref, bc_ref,
                         o_ref, *, use_mxu):
    # x_ref / y_ref / o_ref: (1, C, ts) tiles; weights: (C, C); biases: (C, 1).
    x = x_ref[0]                       # (C, ts), native activation dtype
    y = y_ref[0]
    C = x.shape[0]

    if use_mxu:
        wdt = wg_x_ref.dtype           # MXU operand dtype (f32 or bf16)
        xw = x.astype(wdt)
        yw = y.astype(wdt)
        # Gate: sigmoid(Wg @ cat([x, y]) + bg) == sigmoid(Wg_x@x + Wg_y@y + bg)
        g_lin = (jnp.dot(wg_x_ref[...], xw, preferred_element_type=jnp.float32)
                 + jnp.dot(wg_y_ref[...], yw, preferred_element_type=jnp.float32)
                 + bg_ref[...])
        g = 1.0 / (1.0 + jnp.exp(-g_lin))          # f32 (C, ts)
        # Elementwise gating stays in f32 (safe on v5e: no bf16 VPU/EUP).
        pg = x.astype(jnp.float32) * g
        fg = y.astype(jnp.float32) * (1.0 - g)
        # Output conv: Wc @ cat([FG, PG]) + bc == Wc_fg@FG + Wc_pg@PG + bc
        out = (jnp.dot(wc_fg_ref[...], fg.astype(wdt), preferred_element_type=jnp.float32)
               + jnp.dot(wc_pg_ref[...], pg.astype(wdt), preferred_element_type=jnp.float32)
               + bc_ref[...])
    else:
        # Tiny-C path: unrolled VPU broadcast-MAC; avoids MXU layout changes
        # and the <4%-utilized C-wide systolic contraction.
        xf = x.astype(jnp.float32)
        yf = y.astype(jnp.float32)

        def small_mm(w_ref, v):        # (C, C) @ (C, ts) on the VPU
            w = w_ref[...].astype(jnp.float32)
            acc = w[:, 0:1] * v[0:1, :]
            for c in range(1, C):
                acc = acc + w[:, c:c + 1] * v[c:c + 1, :]
            return acc

        g_lin = small_mm(wg_x_ref, xf) + small_mm(wg_y_ref, yf) + bg_ref[...]
        g = 1.0 / (1.0 + jnp.exp(-g_lin))
        pg = xf * g
        fg = yf * (1.0 - g)
        out = small_mm(wc_fg_ref, fg) + small_mm(wc_pg_ref, pg) + bc_ref[...]

    o_ref[0] = out.astype(o_ref.dtype)


def _round_up(a, b):
    return ((a + b - 1) // b) * b


def _round_down_128(a):
    return max(128, (a // 128) * 128)


def _vmem_capacity_bytes():
    try:
        info = pltpu.get_tpu_info()
        cap = getattr(info, "vmem_capacity_bytes", None)
        if cap:
            return int(cap)
    except Exception:
        pass
    return 128 * 1024 * 1024           # v5e / v6e default


def _vmem_estimate_bytes(C, ts, act_bytes, w_bytes, weight_bufs):
    act_tiles = 2 * 3 * C * ts * act_bytes         # double-buffered x, y, out tiles
    weights = weight_bufs * 4 * C * C * w_bytes    # four (C, C) weight blocks
    biases = weight_bufs * 2 * C * 128 * 4         # lane-padded bias tiles
    scratch = 8 * C * ts * 4                       # f32 temporaries in the body
    return act_tiles + weights + biases + scratch


def gated_fusion_block(x_nchw, y_nchw, params, *,
                       target_step_bytes=3 << 20,
                       use_mxu=None,
                       single_buffer_weights=None):
    """x_nchw, y_nchw: (N, C, H, W). Returns (N, C, H, W) in x's dtype."""
    N, C, H, W = x_nchw.shape
    assert y_nchw.shape == (N, C, H, W)
    S = H * W

    wg_x, wg_y, bg, wc_fg, wc_pg, bc = params
    act_bytes = jnp.dtype(x_nchw.dtype).itemsize
    w_bytes = jnp.dtype(wg_x.dtype).itemsize

    # MXU only pays off once the contraction is reasonably wide.
    if use_mxu is None:
        use_mxu = C > (8 if w_bytes >= 4 else 16)

    # Grid-invariant weights: double-buffering is pure VMEM waste; only worth
    # requesting single-buffering once the blocks are big (matters on v7x).
    if single_buffer_weights is None:
        single_buffer_weights = (4 * C * C * w_bytes) >= (2 << 20)
    weight_bufs = 1 if single_buffer_weights else 2

    vmem_cap = _vmem_capacity_bytes()
    vmem_budget = int(0.70 * vmem_cap)

    # --- Spatial tile selection (lanes) ------------------------------------
    # 1) ~target_step_bytes of streamed activations per grid step so each step
    #    is DMA-dominated (per-step overhead ~0.35us), clamped to [512, 16384]
    #    lanes and to the (rounded-up) spatial extent.
    ts = _round_up(max(512, target_step_bytes // max(1, 3 * C * act_bytes)), 128)
    ts = min(ts, 16384, _round_up(S, 128))
    # 2) Shrink until the working set fits this generation's VMEM budget.
    while ts > 128 and _vmem_estimate_bytes(C, ts, act_bytes, w_bytes,
                                            weight_bufs) > vmem_budget:
        ts = _round_down_128(ts // 2)
    # 3) Keep >= ~8 grid steps (both v7x TensorCores busy, pipeline depth).
    while N * pl.cdiv(S, ts) < 8 and ts > 128:
        ts = _round_down_128(ts // 2)
    # TODO(synk): for very large C (weights alone > ~budget/4) add a two-pass
    # structure (gate+FG/PG pass, then a Co-tiled output conv); simple
    # output-channel tiling is blocked by the full-C gate dependency.

    grid = (N, pl.cdiv(S, ts))

    x3 = x_nchw.reshape(N, C, S)       # free view: NCHW -> (N, C, H*W)
    y3 = y_nchw.reshape(N, C, S)

    act_spec = pl.BlockSpec((1, C, ts), lambda n, j: (n, 0, j))
    if single_buffer_weights:
        w_spec = pl.BlockSpec((C, C), lambda n, j: (0, 0),
                              pipeline_mode=pl.Buffered(1))
        b_spec = pl.BlockSpec((C, 1), lambda n, j: (0, 0),
                              pipeline_mode=pl.Buffered(1))
    else:
        w_spec = pl.BlockSpec((C, C), lambda n, j: (0, 0))
        b_spec = pl.BlockSpec((C, 1), lambda n, j: (0, 0))

    est = _vmem_estimate_bytes(C, ts, act_bytes, w_bytes, weight_bufs)
    vmem_limit = int(min(max(1.3 * est + (4 << 20), 16 << 20), 0.78 * vmem_cap))

    cost = pl.CostEstimate(
        flops=8 * C * C * N * S + 6 * C * N * S,     # two 2C->C 1x1 convs + gating
        transcendentals=N * C * S,                   # sigmoid
        bytes_accessed=3 * N * C * S * act_bytes + 4 * C * C * w_bytes + 2 * C * 4,
    )

    kernel = functools.partial(_gated_fusion_kernel, use_mxu=use_mxu)

    out3 = pl.pallas_call(
        kernel,
        out_shape=jax.ShapeDtypeStruct((N, C, S), x_nchw.dtype),
        grid=grid,
        in_specs=[act_spec, act_spec,
                  w_spec, w_spec, b_spec,
                  w_spec, w_spec, b_spec],
        out_specs=act_spec,
        compiler_params=pltpu.CompilerParams(
            dimension_semantics=("parallel", "parallel"),
            vmem_limit_bytes=vmem_limit),
        cost_estimate=cost,
    )(x3, y3, wg_x, wg_y, bg, wc_fg, wc_pg, bc)

    return out3.reshape(N, C, H, W)


def init_raw_params(key, in_channels):
    """PyTorch-style init for Conv2d(2C -> C, k=1): weight (C, 2C), bias (C,)."""
    C = in_channels
    k1, k2, k3, k4 = jax.random.split(key, 4)
    bound = 1.0 / (2.0 * C) ** 0.5
    wg = jax.random.uniform(k1, (C, 2 * C), jnp.float32, -bound, bound)
    bg = jax.random.uniform(k2, (C,), jnp.float32, -bound, bound)
    wc = jax.random.uniform(k3, (C, 2 * C), jnp.float32, -bound, bound)
    bc = jax.random.uniform(k4, (C,), jnp.float32, -bound, bound)
    return wg, bg, wc, bc


def prepare_params(wg, bg, wc, bc, *, compute_dtype=None):
    """Split the (C, 2C) conv weights into per-branch (C, C) matmul weights.

    compute_dtype optionally casts the weight halves (MXU operands) to e.g.
    bf16; biases / accumulation / gating stay in f32 inside the kernel.
    """
    C = wg.shape[0]
    wdt = compute_dtype if compute_dtype is not None else wg.dtype
    wg_x = wg[:, :C].astype(wdt)   # multiplies x   (first half of cat([x, y]))
    wg_y = wg[:, C:].astype(wdt)   # multiplies y
    wc_fg = wc[:, :C].astype(wdt)  # multiplies FG  (first half of cat([FG, PG]))
    wc_pg = wc[:, C:].astype(wdt)  # multiplies PG
    return (wg_x, wg_y, bg.reshape(C, 1).astype(jnp.float32),
            wc_fg, wc_pg, bc.reshape(C, 1).astype(jnp.float32))


def _reference(x, y, wg, bg, wc, bc):
    """Pure-JAX NCHW reference matching the PyTorch module."""
    hi = jax.lax.Precision.HIGHEST
    cat = jnp.concatenate([x, y], axis=1)                         # (N, 2C, H, W)
    g = jax.nn.sigmoid(jnp.einsum('nchw,oc->nohw', cat, wg, precision=hi)
                       + bg[None, :, None, None])
    pg = x * g
    fg = y * (1.0 - g)
    cat2 = jnp.concatenate([fg, pg], axis=1)
    return (jnp.einsum('nchw,oc->nohw', cat2, wc, precision=hi)
            + bc[None, :, None, None])


if __name__ == "__main__":
    key = jax.random.PRNGKey(0)
    kx, ky, kp = jax.random.split(key, 3)

    N, C, H, W = 2, 4, 16, 16
    x = jax.random.normal(kx, (N, C, H, W), jnp.float32)
    y = jax.random.normal(ky, (N, C, H, W), jnp.float32)

    wg, bg, wc, bc = init_raw_params(kp, C)
    ref = _reference(x, y, wg, bg, wc, bc)
    params = prepare_params(wg, bg, wc, bc)

    # Default path (C=4 -> VPU broadcast-MAC), f32 activations.
    out = jax.block_until_ready(gated_fusion_block(x, y, params))
    assert out.shape == (N, C, H, W) and out.dtype == x.dtype
    err = float(jnp.max(jnp.abs(out - ref)))
    assert jnp.allclose(out, ref, atol=1e-4, rtol=1e-4), err

    # Forced-MXU path (what larger C uses automatically).
    out_mxu = jax.block_until_ready(gated_fusion_block(x, y, params, use_mxu=True))
    err_mxu = float(jnp.max(jnp.abs(out_mxu - ref)))
    assert err_mxu < 1e-2, err_mxu

    # bf16 activation streaming (biggest roofline lever); gating stays f32.
    x_bf, y_bf = x.astype(jnp.bfloat16), y.astype(jnp.bfloat16)
    out_bf = jax.block_until_ready(gated_fusion_block(x_bf, y_bf, params))
    assert out_bf.dtype == jnp.bfloat16
    err_bf = float(jnp.max(jnp.abs(out_bf.astype(jnp.float32) - ref)))
    assert err_bf < 1e-1, err_bf

    print("KERNEL_OK")
</pallas_src>

<mosaic_0001>
module attributes {stable_mosaic.version = 11 : i64} {
  func.func @_gated_fusion_kernel(%arg0: i32, %arg1: i32, %arg2: memref<1x4x128xf32, #tpu.memory_space<vmem>>, %arg3: memref<1x4x128xf32, #tpu.memory_space<vmem>>, %arg4: memref<4x4xf32, #tpu.memory_space<vmem>>, %arg5: memref<4x4xf32, #tpu.memory_space<vmem>>, %arg6: memref<4x1xf32, #tpu.memory_space<vmem>>, %arg7: memref<4x4xf32, #tpu.memory_space<vmem>>, %arg8: memref<4x4xf32, #tpu.memory_space<vmem>>, %arg9: memref<4x1xf32, #tpu.memory_space<vmem>>, %arg10: memref<1x4x128xf32, #tpu.memory_space<vmem>>) attributes {dimension_semantics = [#tpu.dimension_semantics<parallel>, #tpu.dimension_semantics<parallel>], iteration_bounds = array<i64: 2, 2>, scalar_prefetch = 0 : i64, scratch_operands = 0 : i64, tpu.core_type = #tpu.core_type<tc>, window_params = [{transform_indices = @transform_0, window_bounds = array<i64: 1, 4, 128>}, {transform_indices = @transform_1, window_bounds = array<i64: 1, 4, 128>}, {pipeline_mode = #tpu.pipeline_mode<synchronous>, transform_indices = @transform_2, window_bounds = array<i64: 4, 4>}, {pipeline_mode = #tpu.pipeline_mode<synchronous>, transform_indices = @transform_3, window_bounds = array<i64: 4, 4>}, {pipeline_mode = #tpu.pipeline_mode<synchronous>, transform_indices = @transform_4, window_bounds = array<i64: 4, 1>}, {pipeline_mode = #tpu.pipeline_mode<synchronous>, transform_indices = @transform_5, window_bounds = array<i64: 4, 4>}, {pipeline_mode = #tpu.pipeline_mode<synchronous>, transform_indices = @transform_6, window_bounds = array<i64: 4, 4>}, {pipeline_mode = #tpu.pipeline_mode<synchronous>, transform_indices = @transform_7, window_bounds = array<i64: 4, 1>}, {transform_indices = @transform_8, window_bounds = array<i64: 1, 4, 128>}]} {
    %c0 = arith.constant 0 : index
    %c0_0 = arith.constant 0 : index
    %c0_1 = arith.constant 0 : index
    %0 = vector.load %arg2[%c0, %c0_0, %c0_1] : memref<1x4x128xf32, #tpu.memory_space<vmem>>, vector<1x4x128xf32>
    %1 = vector.shape_cast %0 : vector<1x4x128xf32> to vector<4x128xf32>
    %c0_2 = arith.constant 0 : index
    %c0_3 = arith.constant 0 : index
    %c0_4 = arith.constant 0 : index
    %2 = vector.load %arg3[%c0_2, %c0_3, %c0_4] : memref<1x4x128xf32, #tpu.memory_space<vmem>>, vector<1x4x128xf32>
    %3 = vector.shape_cast %2 : vector<1x4x128xf32> to vector<4x128xf32>
    %c0_5 = arith.constant 0 : index
    %c0_6 = arith.constant 0 : index
    %4 = vector.load %arg4[%c0_5, %c0_6] : memref<4x4xf32, #tpu.memory_space<vmem>>, vector<4x4xf32>
    %5 = vector.extract_strided_slice %4 {offsets = [0, 0], sizes = [4, 1], strides = [1, 1]} : vector<4x4xf32> to vector<4x1xf32>
    %6 = vector.extract_strided_slice %1 {offsets = [0, 0], sizes = [1, 128], strides = [1, 1]} : vector<4x128xf32> to vector<1x128xf32>
    %7 = vector.broadcast %5 : vector<4x1xf32> to vector<4x128xf32>
    %8 = vector.broadcast %6 : vector<1x128xf32> to vector<4x128xf32>
    %9 = arith.mulf %7, %8 : vector<4x128xf32>
    %10 = vector.extract_strided_slice %4 {offsets = [0, 1], sizes = [4, 1], strides = [1, 1]} : vector<4x4xf32> to vector<4x1xf32>
    %11 = vector.extract_strided_slice %1 {offsets = [1, 0], sizes = [1, 128], strides = [1, 1]} : vector<4x128xf32> to vector<1x128xf32>
    %12 = vector.broadcast %10 : vector<4x1xf32> to vector<4x128xf32>
    %13 = vector.broadcast %11 : vector<1x128xf32> to vector<4x128xf32>
    %14 = arith.mulf %12, %13 : vector<4x128xf32>
    %15 = arith.addf %9, %14 : vector<4x128xf32>
    %16 = vector.extract_strided_slice %4 {offsets = [0, 2], sizes = [4, 1], strides = [1, 1]} : vector<4x4xf32> to vector<4x1xf32>
    %17 = vector.extract_strided_slice %1 {offsets = [2, 0], sizes = [1, 128], strides = [1, 1]} : vector<4x128xf32> to vector<1x128xf32>
    %18 = vector.broadcast %16 : vector<4x1xf32> to vector<4x128xf32>
    %19 = vector.broadcast %17 : vector<1x128xf32> to vector<4x128xf32>
    %20 = arith.mulf %18, %19 : vector<4x128xf32>
    %21 = arith.addf %15, %20 : vector<4x128xf32>
    %22 = vector.extract_strided_slice %4 {offsets = [0, 3], sizes = [4, 1], strides = [1, 1]} : vector<4x4xf32> to vector<4x1xf32>
    %23 = vector.extract_strided_slice %1 {offsets = [3, 0], sizes = [1, 128], strides = [1, 1]} : vector<4x128xf32> to vector<1x128xf32>
    %24 = vector.broadcast %22 : vector<4x1xf32> to vector<4x128xf32>
    %25 = vector.broadcast %23 : vector<1x128xf32> to vector<4x128xf32>
    %26 = arith.mulf %24, %25 : vector<4x128xf32>
    %27 = arith.addf %21, %26 : vector<4x128xf32>
    %c0_7 = arith.constant 0 : index
    %c0_8 = arith.constant 0 : index
    %28 = vector.load %arg5[%c0_7, %c0_8] : memref<4x4xf32, #tpu.memory_space<vmem>>, vector<4x4xf32>
    %29 = vector.extract_strided_slice %28 {offsets = [0, 0], sizes = [4, 1], strides = [1, 1]} : vector<4x4xf32> to vector<4x1xf32>
    %30 = vector.extract_strided_slice %3 {offsets = [0, 0], sizes = [1, 128], strides = [1, 1]} : vector<4x128xf32> to vector<1x128xf32>
    %31 = vector.broadcast %29 : vector<4x1xf32> to vector<4x128xf32>
    %32 = vector.broadcast %30 : vector<1x128xf32> to vector<4x128xf32>
    %33 = arith.mulf %31, %32 : vector<4x128xf32>
    %34 = vector.extract_strided_slice %28 {offsets = [0, 1], sizes = [4, 1], strides = [1, 1]} : vector<4x4xf32> to vector<4x1xf32>
    %35 = vector.extract_strided_slice %3 {offsets = [1, 0], sizes = [1, 128], strides = [1, 1]} : vector<4x128xf32> to vector<1x128xf32>
    %36 = vector.broadcast %34 : vector<4x1xf32> to vector<4x128xf32>
    %37 = vector.broadcast %35 : vector<1x128xf32> to vector<4x128xf32>
    %38 = arith.mulf %36, %37 : vector<4x128xf32>
    %39 = arith.addf %33, %38 : vector<4x128xf32>
    %40 = vector.extract_strided_slice %28 {offsets = [0, 2], sizes = [4, 1], strides = [1, 1]} : vector<4x4xf32> to vector<4x1xf32>
    %41 = vector.extract_strided_slice %3 {offsets = [2, 0], sizes = [1, 128], strides = [1, 1]} : vector<4x128xf32> to vector<1x128xf32>
    %42 = vector.broadcast %40 : vector<4x1xf32> to vector<4x128xf32>
    %43 = vector.broadcast %41 : vector<1x128xf32> to vector<4x128xf32>
    %44 = arith.mulf %42, %43 : vector<4x128xf32>
    %45 = arith.addf %39, %44 : vector<4x128xf32>
    %46 = vector.extract_strided_slice %28 {offsets = [0, 3], sizes = [4, 1], strides = [1, 1]} : vector<4x4xf32> to vector<4x1xf32>
    %47 = vector.extract_strided_slice %3 {offsets = [3, 0], sizes = [1, 128], strides = [1, 1]} : vector<4x128xf32> to vector<1x128xf32>
    %48 = vector.broadcast %46 : vector<4x1xf32> to vector<4x128xf32>
    %49 = vector.broadcast %47 : vector<1x128xf32> to vector<4x128xf32>
    %50 = arith.mulf %48, %49 : vector<4x128xf32>
    %51 = arith.addf %45, %50 : vector<4x128xf32>
    %52 = arith.addf %27, %51 : vector<4x128xf32>
    %c0_9 = arith.constant 0 : index
    %c0_10 = arith.constant 0 : index
    %53 = vector.load %arg6[%c0_9, %c0_10] : memref<4x1xf32, #tpu.memory_space<vmem>>, vector<4x1xf32>
    %54 = vector.broadcast %53 : vector<4x1xf32> to vector<4x128xf32>
    %55 = arith.addf %52, %54 : vector<4x128xf32>
    %cst = arith.constant 0.000000e+00 : f32
    %56 = vector.broadcast %cst : f32 to vector<4x128xf32>
    %57 = arith.subf %56, %55 : vector<4x128xf32>
    %58 = math.exp %57 : vector<4x128xf32>
    %cst_11 = arith.constant 1.000000e+00 : f32
    %59 = vector.broadcast %cst_11 : f32 to vector<4x128xf32>
    %60 = arith.addf %59, %58 : vector<4x128xf32>
    %cst_12 = arith.constant 1.000000e+00 : f32
    %61 = vector.broadcast %cst_12 : f32 to vector<4x128xf32>
    %62 = arith.divf %61, %60 : vector<4x128xf32>
    %63 = arith.mulf %1, %62 : vector<4x128xf32>
    %cst_13 = arith.constant 1.000000e+00 : f32
    %64 = vector.broadcast %cst_13 : f32 to vector<4x128xf32>
    %65 = arith.subf %64, %62 : vector<4x128xf32>
    %66 = arith.mulf %3, %65 : vector<4x128xf32>
    %c0_14 = arith.constant 0 : index
    %c0_15 = arith.constant 0 : index
    %67 = vector.load %arg7[%c0_14, %c0_15] : memref<4x4xf32, #tpu.memory_space<vmem>>, vector<4x4xf32>
    %68 = vector.extract_strided_slice %67 {offsets = [0, 0], sizes = [4, 1], strides = [1, 1]} : vector<4x4xf32> to vector<4x1xf32>
    %69 = vector.extract_strided_slice %66 {offsets = [0, 0], sizes = [1, 128], strides = [1, 1]} : vector<4x128xf32> to vector<1x128xf32>
    %70 = vector.broadcast %68 : vector<4x1xf32> to vector<4x128xf32>
    %71 = vector.broadcast %69 : vector<1x128xf32> to vector<4x128xf32>
    %72 = arith.mulf %70, %71 : vector<4x128xf32>
    %73 = vector.extract_strided_slice %67 {offsets = [0, 1], sizes = [4, 1], strides = [1, 1]} : vector<4x4xf32> to vector<4x1xf32>
    %74 = vector.extract_strided_slice %66 {offsets = [1, 0], sizes = [1, 128], strides = [1, 1]} : vector<4x128xf32> to vector<1x128xf32>
    %75 = vector.broadcast %73 : vector<4x1xf32> to vector<4x128xf32>
    %76 = vector.broadcast %74 : vector<1x128xf32> to vector<4x128xf32>
    %77 = arith.mulf %75, %76 : vector<4x128xf32>
    %78 = arith.addf %72, %77 : vector<4x128xf32>
    %79 = vector.extract_strided_slice %67 {offsets = [0, 2], sizes = [4, 1], strides = [1, 1]} : vector<4x4xf32> to vector<4x1xf32>
    %80 = vector.extract_strided_slice %66 {offsets = [2, 0], sizes = [1, 128], strides = [1, 1]} : vector<4x128xf32> to vector<1x128xf32>
    %81 = vector.broadcast %79 : vector<4x1xf32> to vector<4x128xf32>
    %82 = vector.broadcast %80 : vector<1x128xf32> to vector<4x128xf32>
    %83 = arith.mulf %81, %82 : vector<4x128xf32>
    %84 = arith.addf %78, %83 : vector<4x128xf32>
    %85 = vector.extract_strided_slice %67 {offsets = [0, 3], sizes = [4, 1], strides = [1, 1]} : vector<4x4xf32> to vector<4x1xf32>
    %86 = vector.extract_strided_slice %66 {offsets = [3, 0], sizes = [1, 128], strides = [1, 1]} : vector<4x128xf32> to vector<1x128xf32>
    %87 = vector.broadcast %85 : vector<4x1xf32> to vector<4x128xf32>
    %88 = vector.broadcast %86 : vector<1x128xf32> to vector<4x128xf32>
    %89 = arith.mulf %87, %88 : vector<4x128xf32>
    %90 = arith.addf %84, %89 : vector<4x128xf32>
    %c0_16 = arith.constant 0 : index
    %c0_17 = arith.constant 0 : index
    %91 = vector.load %arg8[%c0_16, %c0_17] : memref<4x4xf32, #tpu.memory_space<vmem>>, vector<4x4xf32>
    %92 = vector.extract_strided_slice %91 {offsets = [0, 0], sizes = [4, 1], strides = [1, 1]} : vector<4x4xf32> to vector<4x1xf32>
    %93 = vector.extract_strided_slice %63 {offsets = [0, 0], sizes = [1, 128], strides = [1, 1]} : vector<4x128xf32> to vector<1x128xf32>
    %94 = vector.broadcast %92 : vector<4x1xf32> to vector<4x128xf32>
    %95 = vector.broadcast %93 : vector<1x128xf32> to vector<4x128xf32>
    %96 = arith.mulf %94, %95 : vector<4x128xf32>
    %97 = vector.extract_strided_slice %91 {offsets = [0, 1], sizes = [4, 1], strides = [1, 1]} : vector<4x4xf32> to vector<4x1xf32>
    %98 = vector.extract_strided_slice %63 {offsets = [1, 0], sizes = [1, 128], strides = [1, 1]} : vector<4x128xf32> to vector<1x128xf32>
    %99 = vector.broadcast %97 : vector<4x1xf32> to vector<4x128xf32>
    %100 = vector.broadcast %98 : vector<1x128xf32> to vector<4x128xf32>
    %101 = arith.mulf %99, %100 : vector<4x128xf32>
    %102 = arith.addf %96, %101 : vector<4x128xf32>
    %103 = vector.extract_strided_slice %91 {offsets = [0, 2], sizes = [4, 1], strides = [1, 1]} : vector<4x4xf32> to vector<4x1xf32>
    %104 = vector.extract_strided_slice %63 {offsets = [2, 0], sizes = [1, 128], strides = [1, 1]} : vector<4x128xf32> to vector<1x128xf32>
    %105 = vector.broadcast %103 : vector<4x1xf32> to vector<4x128xf32>
    %106 = vector.broadcast %104 : vector<1x128xf32> to vector<4x128xf32>
    %107 = arith.mulf %105, %106 : vector<4x128xf32>
    %108 = arith.addf %102, %107 : vector<4x128xf32>
    %109 = vector.extract_strided_slice %91 {offsets = [0, 3], sizes = [4, 1], strides = [1, 1]} : vector<4x4xf32> to vector<4x1xf32>
    %110 = vector.extract_strided_slice %63 {offsets = [3, 0], sizes = [1, 128], strides = [1, 1]} : vector<4x128xf32> to vector<1x128xf32>
    %111 = vector.broadcast %109 : vector<4x1xf32> to vector<4x128xf32>
    %112 = vector.broadcast %110 : vector<1x128xf32> to vector<4x128xf32>
    %113 = arith.mulf %111, %112 : vector<4x128xf32>
    %114 = arith.addf %108, %113 : vector<4x128xf32>
    %115 = arith.addf %90, %114 : vector<4x128xf32>
    %c0_18 = arith.constant 0 : index
    %c0_19 = arith.constant 0 : index
    %116 = vector.load %arg9[%c0_18, %c0_19] : memref<4x1xf32, #tpu.memory_space<vmem>>, vector<4x1xf32>
    %117 = vector.broadcast %116 : vector<4x1xf32> to vector<4x128xf32>
    %118 = arith.addf %115, %117 : vector<4x128xf32>
    %c0_20 = arith.constant 0 : index
    %c0_21 = arith.constant 0 : index
    %c0_22 = arith.constant 0 : index
    %119 = vector.load %arg10[%c0_20, %c0_21, %c0_22] : memref<1x4x128xf32, #tpu.memory_space<vmem>>, vector<1x4x128xf32>
    %120 = vector.shape_cast %119 : vector<1x4x128xf32> to vector<4x128xf32>
    %121 = vector.shape_cast %118 : vector<4x128xf32> to vector<1x4x128xf32>
    tpu.vector_store %arg10[%c0_20, %c0_21, %c0_22], %121 {strides = array<i32>} : memref<1x4x128xf32, #tpu.memory_space<vmem>>, vector<1x4x128xf32>,
    return
  }
  func.func @transform_0(%arg0: i32, %arg1: i32) -> (i32, i32, i32) {
    %c0_i32 = arith.constant 0 : i32
    %c0_i32_0 = arith.constant 0 : i32
    return %arg0, %c0_i32, %arg1 : i32, i32, i32
  }
  func.func @transform_1(%arg0: i32, %arg1: i32) -> (i32, i32, i32) {
    %c0_i32 = arith.constant 0 : i32
    %c0_i32_0 = arith.constant 0 : i32
    return %arg0, %c0_i32, %arg1 : i32, i32, i32
  }
  func.func @transform_2(%arg0: i32, %arg1: i32) -> (i32, i32) {
    %c0_i32 = arith.constant 0 : i32
    %c0_i32_0 = arith.constant 0 : i32
    %c0_i32_1 = arith.constant 0 : i32
    return %c0_i32, %c0_i32_0 : i32, i32
  }
  func.func @transform_3(%arg0: i32, %arg1: i32) -> (i32, i32) {
    %c0_i32 = arith.constant 0 : i32
    %c0_i32_0 = arith.constant 0 : i32
    %c0_i32_1 = arith.constant 0 : i32
    return %c0_i32, %c0_i32_0 : i32, i32
  }
  func.func @transform_4(%arg0: i32, %arg1: i32) -> (i32, i32) {
    %c0_i32 = arith.constant 0 : i32
    %c0_i32_0 = arith.constant 0 : i32
    %c0_i32_1 = arith.constant 0 : i32
    return %c0_i32, %c0_i32_0 : i32, i32
  }
  func.func @transform_5(%arg0: i32, %arg1: i32) -> (i32, i32) {
    %c0_i32 = arith.constant 0 : i32
    %c0_i32_0 = arith.constant 0 : i32
    %c0_i32_1 = arith.constant 0 : i32
    return %c0_i32, %c0_i32_0 : i32, i32
  }
  func.func @transform_6(%arg0: i32, %arg1: i32) -> (i32, i32) {
    %c0_i32 = arith.constant 0 : i32
    %c0_i32_0 = arith.constant 0 : i32
    %c0_i32_1 = arith.constant 0 : i32
    return %c0_i32, %c0_i32_0 : i32, i32
  }
  func.func @transform_7(%arg0: i32, %arg1: i32) -> (i32, i32) {
    %c0_i32 = arith.constant 0 : i32
    %c0_i32_0 = arith.constant 0 : i32
    %c0_i32_1 = arith.constant 0 : i32
    return %c0_i32, %c0_i32_0 : i32, i32
  }
  func.func @transform_8(%arg0: i32, %arg1: i32) -> (i32, i32, i32) {
    %c0_i32 = arith.constant 0 : i32
    %c0_i32_0 = arith.constant 0 : i32
    return %arg0, %c0_i32, %arg1 : i32, i32, i32
  }
}

</mosaic_0001>

<llo_original>
// kernel: tpu_custom_call.1
$region0: #{tpu_custom_call.1}
  #allocation0 [shape = 'u32[]', space=smem, size = 0x4, offset = 0x4, fixed_abs, tag = 'smem constant byte address 0x4 - core index']
  #allocation1 [shape = 'u32[144,128]{1,0:T(1,128)}', space=vmem, size = 0x12000, scoped, tag = 'internal scratch']
  %s0 = inlined_call_operand.hbm [shape: f32[2,4,256], index: 0, kind: input, shape index: {}]
  %s1 = inlined_call_operand.hbm [shape: f32[2,4,256], index: 1, kind: input, shape index: {}]
  %s2 = inlined_call_operand.vmem [shape: f32[4,4], index: 2, kind: input, shape index: {}]
  %s3 = inlined_call_operand.vmem [shape: f32[4,4], index: 3, kind: input, shape index: {}]
  %s4 = inlined_call_operand.vmem [shape: f32[4,1], index: 4, kind: input, shape index: {}]
  %s5 = inlined_call_operand.vmem [shape: f32[4,4], index: 5, kind: input, shape index: {}]
  %s6 = inlined_call_operand.vmem [shape: f32[4,4], index: 6, kind: input, shape index: {}]
  %s7 = inlined_call_operand.vmem [shape: f32[4,1], index: 7, kind: input, shape index: {}]
  %s8 = inlined_call_operand.hbm [shape: f32[2,4,256], index: 8, kind: output, shape index: {}]
  %s9 = sld [smem:[#allocation0]]
  $region73: #{tpu_custom_call.1} parent=0
    _
  %s11 = ssub.s32 1, %s9
  %s12 = scalar_select 0, %s11, %s9
  $region1: #{tpu_custom_call.1} parent=0
    #allocation2 [shape = 'u8[4096]{0}', space=vmem, size = 0x1000, scoped, tag = 'input window, operand 0']
    #allocation3 [shape = 's32[2]{0}', space=sflag, size = 0x8, scoped, tag = 'scoped memory for tpu_custom_call.1']
    #allocation4 [shape = 's32[2]{0}', space=sflag, size = 0x8, scoped, tag = 'scoped memory for tpu_custom_call.1']
    #allocation5 [shape = 'u8[4096]{0}', space=vmem, size = 0x1000, scoped, tag = 'input window, operand 1']
    #allocation6 [shape = 's32[2]{0}', space=sflag, size = 0x8, scoped, tag = 'scoped memory for tpu_custom_call.1']
    #allocation7 [shape = 'u8[4096]{0}', space=vmem, size = 0x1000, scoped, tag = 'output window, operand 0']
    %13 = vsyncpa [#allocation3], 0
    %s14 = scalar_lea.sflag [#allocation3], 1
    %15 = vsyncpa %s14, 0
    %16 = vsyncpa [#allocation6], 0
    %s17 = scalar_lea.sflag [#allocation6], 1
    %18 = vsyncpa %s17, 0
    %19 = vsyncpa [#allocation4], 0
    %s20 = scalar_lea.sflag [#allocation4], 1
    %21 = vsyncpa %s20, 0
    loop: start=0, step=1, limit=6
    $region2: #{tpu_custom_call.1} parent=1 // loop_pre_header
      _
    $region3: #{tpu_custom_call.1} parent=1 // loop_header
      %s23 = sphi 0, %s27
      %p24 = scmp.ge.s32.totalorder %s23, 6
      %s30 = sphi 0, %s42
      %s31 = sphi 0, %s38
      %s32 = sphi 0, %s30
      %s33 = sphi 0, %s31
      %s34 = sphi 0, %s32
      %s35 = sphi 0, %s33
      %s47 = sphi 0, %s49
      %s50 = sphi 0, %s47
      %s51 = sphi 0, %s50
      %s67 = sphi 0, %s51
      %s75 = sphi 0, %s77
      %s78 = sphi 0, %s75
      %s79 = sphi 0, %s78
      %s95 = sphi 0, %s79
      %s99 = sphi 0, %s99
      %s101 = sphi 0, %s99
      %s102 = sphi 0, %s101
      %s116 = sphi 0, %s102
      %s120 = sphi 0, %s120
      %s122 = sphi 0, %s120
      %s123 = sphi 0, %s122
      %s137 = sphi 0, %s123
      %s141 = sphi 0, %s141
      %s143 = sphi 0, %s141
      %s144 = sphi 0, %s143
      %s158 = sphi 0, %s144
      %s162 = sphi 0, %s162
      %s164 = sphi 0, %s162
      %s165 = sphi 0, %s164
      %s179 = sphi 0, %s165
      %s183 = sphi 0, %s183
      %s185 = sphi 0, %s183
      %s186 = sphi 0, %s185
      %s200 = sphi 0, %s186
      %s204 = sphi 0, %s204
      %s206 = sphi 0, %s204
      %s207 = sphi 0, %s206
      %s221 = sphi 0, %s207
      %s229 = sphi 0, %s231
      %s232 = sphi 0, %s229
      %s233 = sphi 0, %s232
      %s249 = sphi 0, %s233
    $region4: #{tpu_custom_call.1} parent=1 // loop_header_branch
      %26 = sbr.rel (%p24) target = $region8
    $region5: #{tpu_custom_call.1} parent=1 // loop_body
      %s28 = ssub.s32 %s23, 1
      %s29 = ssub.s32 %s23, 2
      %s36 = sadd.s32 1, %s31
      %p37 = scmp.ge.s32.totalorder %s36, 2
      %s38 = scalar_select %p37, 0, %s36
      %s39 = sadd.s32 1, %s30
      %s40 = scalar_select %p37, %s39, %s30
      %p41 = scmp.ge.s32.totalorder %s40, 2
      %s42 = scalar_select %p41, 0, %s40
      %s43 = ssub.s32 %s30, %s42
      %s44 = ssub.s32 %s31, %s38
      %s45 = sor.u32 %s43, %s44
      %p46 = scmp.eq.s32.totalorder %s45, 0
      %s48 = sadd.s32 %s47, 1
      %s49 = scalar_select %p46, %s47, %s48
      %p52 = pneg %p46
      %p53 = scmp.eq.s32.totalorder %s23, 3
      %p54 = por %p52, %p53
      %p55 = scmp.ne.s32.totalorder %s47, %s50
      %p56 = scmp.eq.s32.totalorder %s23, 0
      %p57 = por %p55, %p56
      %p58 = scmp.ne.s32.totalorder %s47, %s50
      %p59 = scmp.eq.s32.totalorder %s28, 3
      %p60 = por %p58, %p59
      %p61 = scmp.ne.s32.totalorder %s50, %s51
      %p62 = scmp.eq.s32.totalorder %s28, 0
      %p63 = por %p61, %p62
      %p64 = scmp.ne.s32.totalorder %s50, %s51
      %p65 = scmp.eq.s32.totalorder %s29, 3
      %p66 = por %p64, %p65
      %p68 = scmp.ne.s32.totalorder %s51, %s67
      %p69 = scmp.eq.s32.totalorder %s29, 0
      %p70 = por %p68, %p69
      %s71 = ssub.s32 %s30, %s42
      %s72 = ssub.s32 %s31, %s38
      %s73 = sor.u32 %s71, %s72
      %p74 = scmp.eq.s32.totalorder %s73, 0
      %s76 = sadd.s32 %s75, 1
      %s77 = scalar_select %p74, %s75, %s76
      %p80 = pneg %p74
      %p81 = scmp.eq.s32.totalorder %s23, 3
      %p82 = por %p80, %p81
      %p83 = scmp.ne.s32.totalorder %s75, %s78
      %p84 = scmp.eq.s32.totalorder %s23, 0
      %p85 = por %p83, %p84
      %p86 = scmp.ne.s32.totalorder %s75, %s78
      %p87 = scmp.eq.s32.totalorder %s28, 3
      %p88 = por %p86, %p87
      %p89 = scmp.ne.s32.totalorder %s78, %s79
      %p90 = scmp.eq.s32.totalorder %s28, 0
      %p91 = por %p89, %p90
      %p92 = scmp.ne.s32.totalorder %s78, %s79
      %p93 = scmp.eq.s32.totalorder %s29, 3
      %p94 = por %p92, %p93
      %p96 = scmp.ne.s32.totalorder %s79, %s95
      %p97 = scmp.eq.s32.totalorder %s29, 0
      %p98 = por %p96, %p97
      %s100 = sadd.s32 %s99, 1
      %p103 = scmp.eq.s32.totalorder %s23, 3
      %p104 = scmp.ne.s32.totalorder %s99, %s101
      %p105 = scmp.eq.s32.totalorder %s23, 0
      %p106 = por %p104, %p105
      %p107 = scmp.ne.s32.totalorder %s99, %s101
      %p108 = scmp.eq.s32.totalorder %s28, 3
      %p109 = por %p107, %p108
      %p110 = scmp.ne.s32.totalorder %s101, %s102
      %p111 = scmp.eq.s32.totalorder %s28, 0
      %p112 = por %p110, %p111
      %p113 = scmp.ne.s32.totalorder %s101, %s102
      %p114 = scmp.eq.s32.totalorder %s29, 3
      %p115 = por %p113, %p114
      %p117 = scmp.ne.s32.totalorder %s102, %s116
      %p118 = scmp.eq.s32.totalorder %s29, 0
      %p119 = por %p117, %p118
      %s121 = sadd.s32 %s120, 1
      %p124 = scmp.eq.s32.totalorder %s23, 3
      %p125 = scmp.ne.s32.totalorder %s120, %s122
      %p126 = scmp.eq.s32.totalorder %s23, 0
      %p127 = por %p125, %p126
      %p128 = scmp.ne.s32.totalorder %s120, %s122
      %p129 = scmp.eq.s32.totalorder %s28, 3
      %p130 = por %p128, %p129
      %p131 = scmp.ne.s32.totalorder %s122, %s123
      %p132 = scmp.eq.s32.totalorder %s28, 0
      %p133 = por %p131, %p132
      %p134 = scmp.ne.s32.totalorder %s122, %s123
      %p135 = scmp.eq.s32.totalorder %s29, 3
      %p136 = por %p134, %p135
      %p138 = scmp.ne.s32.totalorder %s123, %s137
      %p139 = scmp.eq.s32.totalorder %s29, 0
      %p140 = por %p138, %p139
      %s142 = sadd.s32 %s141, 1
      %p145 = scmp.eq.s32.totalorder %s23, 3
      %p146 = scmp.ne.s32.totalorder %s141, %s143
      %p147 = scmp.eq.s32.totalorder %s23, 0
      %p148 = por %p146, %p147
      %p149 = scmp.ne.s32.totalorder %s141, %s143
      %p150 = scmp.eq.s32.totalorder %s28, 3
      %p151 = por %p149, %p150
      %p152 = scmp.ne.s32.totalorder %s143, %s144
      %p153 = scmp.eq.s32.totalorder %s28, 0
      %p154 = por %p152, %p153
      %p155 = scmp.ne.s32.totalorder %s143, %s144
      %p156 = scmp.eq.s32.totalorder %s29, 3
      %p157 = por %p155, %p156
      %p159 = scmp.ne.s32.totalorder %s144, %s158
      %p160 = scmp.eq.s32.totalorder %s29, 0
      %p161 = por %p159, %p160
      %s163 = sadd.s32 %s162, 1
      %p166 = scmp.eq.s32.totalorder %s23, 3
      %p167 = scmp.ne.s32.totalorder %s162, %s164
      %p168 = scmp.eq.s32.totalorder %s23, 0
      %p169 = por %p167, %p168
      %p170 = scmp.ne.s32.totalorder %s162, %s164
      %p171 = scmp.eq.s32.totalorder %s28, 3
      %p172 = por %p170, %p171
      %p173 = scmp.ne.s32.totalorder %s164, %s165
      %p174 = scmp.eq.s32.totalorder %s28, 0
      %p175 = por %p173, %p174
      %p176 = scmp.ne.s32.totalorder %s164, %s165
      %p177 = scmp.eq.s32.totalorder %s29, 3
      %p178 = por %p176, %p177
      %p180 = scmp.ne.s32.totalorder %s165, %s179
      %p181 = scmp.eq.s32.totalorder %s29, 0
      %p182 = por %p180, %p181
      %s184 = sadd.s32 %s183, 1
      %p187 = scmp.eq.s32.totalorder %s23, 3
      %p188 = scmp.ne.s32.totalorder %s183, %s185
      %p189 = scmp.eq.s32.totalorder %s23, 0
      %p190 = por %p188, %p189
      %p191 = scmp.ne.s32.totalorder %s183, %s185
      %p192 = scmp.eq.s32.totalorder %s28, 3
      %p193 = por %p191, %p192
      %p194 = scmp.ne.s32.totalorder %s185, %s186
      %p195 = scmp.eq.s32.totalorder %s28, 0
      %p196 = por %p194, %p195
      %p197 = scmp.ne.s32.totalorder %s185, %s186
      %p198 = scmp.eq.s32.totalorder %s29, 3
      %p199 = por %p197, %p198
      %p201 = scmp.ne.s32.totalorder %s186, %s200
      %p202 = scmp.eq.s32.totalorder %s29, 0
      %p203 = por %p201, %p202
      %s205 = sadd.s32 %s204, 1
      %p208 = scmp.eq.s32.totalorder %s23, 3
      %p209 = scmp.ne.s32.totalorder %s204, %s206
      %p210 = scmp.eq.s32.totalorder %s23, 0
      %p211 = por %p209, %p210
      %p212 = scmp.ne.s32.totalorder %s204, %s206
      %p213 = scmp.eq.s32.totalorder %s28, 3
      %p214 = por %p212, %p213
      %p215 = scmp.ne.s32.totalorder %s206, %s207
      %p216 = scmp.eq.s32.totalorder %s28, 0
      %p217 = por %p215, %p216
      %p218 = scmp.ne.s32.totalorder %s206, %s207
      %p219 = scmp.eq.s32.totalorder %s29, 3
      %p220 = por %p218, %p219
      %p222 = scmp.ne.s32.totalorder %s207, %s221
      %p223 = scmp.eq.s32.totalorder %s29, 0
      %p224 = por %p222, %p223
      %s225 = ssub.s32 %s30, %s42
      %s226 = ssub.s32 %s31, %s38
      %s227 = sor.u32 %s225, %s226
      %p228 = scmp.eq.s32.totalorder %s227, 0
      %s230 = sadd.s32 %s229, 1
      %s231 = scalar_select %p228, %s229, %s230
      %p234 = pneg %p228
      %p235 = scmp.eq.s32.totalorder %s23, 3
      %p236 = por %p234, %p235
      %p237 = scmp.ne.s32.totalorder %s229, %s232
      %p238 = scmp.eq.s32.totalorder %s23, 0
      %p239 = por %p237, %p238
      %p240 = scmp.ne.s32.totalorder %s229, %s232
      %p241 = scmp.eq.s32.totalorder %s28, 3
      %p242 = por %p240, %p241
      %p243 = scmp.ne.s32.totalorder %s232, %s233
      %p244 = scmp.eq.s32.totalorder %s28, 0
      %p245 = por %p243, %p244
      %p246 = scmp.ne.s32.totalorder %s232, %s233
      %p247 = scmp.eq.s32.totalorder %s29, 3
      %p248 = por %p246, %p247
      %p250 = scmp.ne.s32.totalorder %s233, %s249
      %p251 = scmp.eq.s32.totalorder %s29, 0
      %p252 = por %p250, %p251
      %p253 = scmp.le.s32.totalorder 1, %s23
      %p254 = scmp.lt.s32.totalorder %s23, 5
      %p255 = pnand %p253, %p254
      %p256 = pneg %p255
      // Predicated region
      $region9: #{tpu_custom_call.1} parent=5 // pred_check
        _
      $region10: #{tpu_custom_call.1} parent=5 // pred_check_branch
        %258 = sbr.rel (%p255) target = $region12
      $region11: #{tpu_custom_call.1} parent=5 // pred_region
        %s259 = ssub.s32 %s23, 1
        // Predicated region
        $region13: #{tpu_custom_call.1} parent=11 // pred_check
          %p260 = pneg %p112
        $region14: #{tpu_custom_call.1} parent=11 // pred_check_branch
          %262 = sbr.rel (%p260) target = $region16
        $region15: #{tpu_custom_call.1} parent=11 // pred_region
          _
        $region16: #{tpu_custom_call.1} parent=11 // pred_fallthru
          _
        // Predicated region
        $region17: #{tpu_custom_call.1} parent=11 // pred_check
          %p263 = pneg %p133
        $region18: #{tpu_custom_call.1} parent=11 // pred_check_branch
          %265 = sbr.rel (%p263) target = $region20
        $region19: #{tpu_custom_call.1} parent=11 // pred_region
          _
        $region20: #{tpu_custom_call.1} parent=11 // pred_fallthru
          _
        // Predicated region
        $region21: #{tpu_custom_call.1} parent=11 // pred_check
          %p266 = pneg %p154
        $region22: #{tpu_custom_call.1} parent=11 // pred_check_branch
          %268 = sbr.rel (%p266) target = $region24
        $region23: #{tpu_custom_call.1} parent=11 // pred_region
          _
        $region24: #{tpu_custom_call.1} parent=11 // pred_fallthru
          _
        // Predicated region
        $region25: #{tpu_custom_call.1} parent=11 // pred_check
          %p269 = pneg %p175
        $region26: #{tpu_custom_call.1} parent=11 // pred_check_branch
          %271 = sbr.rel (%p269) target = $region28
        $region27: #{tpu_custom_call.1} parent=11 // pred_region
          _
        $region28: #{tpu_custom_call.1} parent=11 // pred_fallthru
          _
        // Predicated region
        $region29: #{tpu_custom_call.1} parent=11 // pred_check
          %p272 = pneg %p196
        $region30: #{tpu_custom_call.1} parent=11 // pred_check_branch
          %274 = sbr.rel (%p272) target = $region32
        $region31: #{tpu_custom_call.1} parent=11 // pred_region
          _
        $region32: #{tpu_custom_call.1} parent=11 // pred_fallthru
          _
        // Predicated region
        $region33: #{tpu_custom_call.1} parent=11 // pred_check
          %p275 = pneg %p217
        $region34: #{tpu_custom_call.1} parent=11 // pred_check_branch
          %277 = sbr.rel (%p275) target = $region36
        $region35: #{tpu_custom_call.1} parent=11 // pred_region
          _
        $region36: #{tpu_custom_call.1} parent=11 // pred_fallthru
          _
      $region12: #{tpu_custom_call.1} parent=5 // pred_fallthru
        _
      %p278 = scmp.lt.s32.totalorder %s23, 4
      // Predicated region
      $region37: #{tpu_custom_call.1} parent=5 // pred_check
        %p279 = pneg %p278
      $region38: #{tpu_custom_call.1} parent=5 // pred_check_branch
        %281 = sbr.rel (%p279) target = $region40
      $region39: #{tpu_custom_call.1} parent=5 // pred_region
        // Predicated region
        $region41: #{tpu_custom_call.1} parent=39 // pred_check
          %p282 = pneg %p57
        $region42: #{tpu_custom_call.1} parent=39 // pred_check_branch
          %284 = sbr.rel (%p282) target = $region44
        $region43: #{tpu_custom_call.1} parent=39 // pred_region
          %s285 = sand.u32 %s47, 1
          %s286 = scalar_lea.sflag [#allocation3], %s285
          %s287 = sand.u32 %s47, 1
          %s288 = smul.addr %s287, 4
          %s289 = scalar_lea.vmem [#allocation2], %s288
          %s291 = ssub.s32 64, 64
          %292 = vsyncadd %s286, %s291
          %s293 = smul.addr %s30, 2
          %s294 = sadd.s32 %s31, %s293
          %s295 = smul.addr %s294, 64
          %s296 = scalar_lea.hbm %s0, %s295
          %s298 = sshll.u32 %s289, 4
          %s299 = int_to_ptr.vmem [resolvable:$true] %s298
          %301 = dma.hbm_to_vmem [thread:$0]  %s296, 64, %s299, %s286
        $region44: #{tpu_custom_call.1} parent=39 // pred_fallthru
          _
        // Predicated region
        $region45: #{tpu_custom_call.1} parent=39 // pred_check
          %p302 = pneg %p85
        $region46: #{tpu_custom_call.1} parent=39 // pred_check_branch
          %304 = sbr.rel (%p302) target = $region48
        $region47: #{tpu_custom_call.1} parent=39 // pred_region
          %s305 = sand.u32 %s75, 1
          %s306 = scalar_lea.sflag [#allocation6], %s305
          %s307 = sand.u32 %s75, 1
          %s308 = smul.addr %s307, 4
          %s309 = scalar_lea.vmem [#allocation5], %s308
          %s311 = ssub.s32 64, 64
          %312 = vsyncadd %s306, %s311
          %s313 = smul.addr %s30, 2
          %s314 = sadd.s32 %s31, %s313
          %s315 = smul.addr %s314, 64
          %s316 = scalar_lea.hbm %s1, %s315
          %s318 = sshll.u32 %s309, 4
          %s319 = int_to_ptr.vmem [resolvable:$true] %s318
          %321 = dma.hbm_to_vmem [thread:$0]  %s316, 64, %s319, %s306
        $region48: #{tpu_custom_call.1} parent=39 // pred_fallthru
          _
      $region40: #{tpu_custom_call.1} parent=5 // pred_fallthru
        _
      %p322 = scmp.le.s32.totalorder 1, %s23
      %p323 = scmp.lt.s32.totalorder %s23, 5
      %p324 = pnand %p322, %p323
      %p325 = pneg %p324
      // Predicated region
      $region49: #{tpu_custom_call.1} parent=5 // pred_check
        _
      $region50: #{tpu_custom_call.1} parent=5 // pred_check_branch
        %327 = sbr.rel (%p324) target = $region52
      $region51: #{tpu_custom_call.1} parent=5 // pred_region
        %s328 = ssub.s32 %s23, 1
        %s329 = sand.u32 %s50, 1
        %s330 = scalar_lea.sflag [#allocation3], %s329
        %s331 = sand.u32 %s50, 1
        %s332 = smul.addr %s331, 4
        %s333 = scalar_lea.vmem [#allocation2], %s332
        // Predicated region
        $region53: #{tpu_custom_call.1} parent=51 // pred_check
          %p334 = pneg %p63
        $region54: #{tpu_custom_call.1} parent=51 // pred_check_branch
          %336 = sbr.rel (%p334) target = $region56
        $region55: #{tpu_custom_call.1} parent=51 // pred_region
          %337 = dma.done %s330, 64
        $region56: #{tpu_custom_call.1} parent=51 // pred_fallthru
          _
        %s338 = sand.u32 %s78, 1
        %s339 = scalar_lea.sflag [#allocation6], %s338
        %s340 = sand.u32 %s78, 1
        %s341 = smul.addr %s340, 4
        %s342 = scalar_lea.vmem [#allocation5], %s341
        // Predicated region
        $region57: #{tpu_custom_call.1} parent=51 // pred_check
          %p343 = pneg %p91
        $region58: #{tpu_custom_call.1} parent=51 // pred_check_branch
          %345 = sbr.rel (%p343) target = $region60
        $region59: #{tpu_custom_call.1} parent=51 // pred_region
          %346 = dma.done %s339, 64
        $region60: #{tpu_custom_call.1} parent=51 // pred_fallthru
          _
        %s347 = sand.u32 %s50, 1
        %s348 = scalar_lea.sflag [#allocation3], %s347
        %s349 = sand.u32 %s50, 1
        %s350 = smul.addr %s349, 4
        %s351 = scalar_lea.vmem [#allocation2], %s350
        %p352 = pneg %p63
        %p353 = pneg %p60
        %s354 = sand.u32 %s78, 1
        %s355 = scalar_lea.sflag [#allocation6], %s354
        %s356 = sand.u32 %s78, 1
        %s357 = smul.addr %s356, 4
        %s358 = scalar_lea.vmem [#allocation5], %s357
        %p359 = pneg %p91
        %p360 = pneg %p88
        %p361 = pneg %p112
        %p362 = pneg %p109
        %p363 = pneg %p133
        %p364 = pneg %p130
        %p365 = pneg %p154
        %p366 = pneg %p151
        %p367 = pneg %p175
        %p368 = pneg %p172
        %p369 = pneg %p196
        %p370 = pneg %p193
        %p371 = pneg %p217
        %p372 = pneg %p214
        %p373 = pneg %p245
        %p374 = pneg %p242
        %s375 = sand.u32 %s232, 1
        %s376 = scalar_lea.sflag [#allocation4], %s375
        %s377 = sand.u32 %s232, 1
        %s378 = smul.addr %s377, 4
        %s379 = scalar_lea.vmem [#allocation7], %s378
        %v380 = vld [vmem:[%s333] sm:$0xf]
        %v381 = vld [vmem:[%s342] sm:$0xf]
        %v382 = vld [vmem:[%s2] sm:$0xf]
        %384 = vset.pattern.permute.xlu0 0
        %385 = vperm.xlu0 %384, %v382
        %v386 = vpop.permute.xlu0 %385
        %v388 = vlaneseq
        %v389 = vshrl.u32 %v388, 7
        %v390 = vsub.s32 0, %v389
        %v391 = vrot.slane %v380, %v390
        %v392 = vmul.f32 %v386, %v391
        %393 = vset.pattern.permute.xlu0 1
        %394 = vperm.xlu0 %393, %v382
        %v395 = vpop.permute.xlu0 %394
        %v397 = vlaneseq
        %v398 = vshrl.u32 %v397, 7
        %v399 = vsub.s32 1, %v398
        %v400 = vrot.slane %v380, %v399
        %v401 = vmul.f32 %v395, %v400
        %v402 = vadd.f32 %v392, %v401
        %403 = vset.pattern.permute.xlu0 2
        %404 = vperm.xlu0 %403, %v382
        %v405 = vpop.permute.xlu0 %404
        %v407 = vlaneseq
        %v408 = vshrl.u32 %v407, 7
        %v409 = vsub.s32 2, %v408
        %v410 = vrot.slane %v380, %v409
        %v411 = vmul.f32 %v405, %v410
        %v412 = vadd.f32 %v402, %v411
        %413 = vset.pattern.permute.xlu0 3
        %414 = vperm.xlu0 %413, %v382
        %v415 = vpop.permute.xlu0 %414
        %v417 = vlaneseq
        %v418 = vshrl.u32 %v417, 7
        %v419 = vsub.s32 3, %v418
        %v420 = vrot.slane %v380, %v419
        %v421 = vmul.f32 %v415, %v420
        %v422 = vadd.f32 %v412, %v421
        %v423 = vld [vmem:[%s3] sm:$0xf]
        %425 = vset.pattern.permute.xlu0 0
        %426 = vperm.xlu0 %425, %v423
        %v427 = vpop.permute.xlu0 %426
        %v429 = vlaneseq
        %v430 = vshrl.u32 %v429, 7
        %v431 = vsub.s32 0, %v430
        %v432 = vrot.slane %v381, %v431
        %v433 = vmul.f32 %v427, %v432
        %434 = vset.pattern.permute.xlu0 1
        %435 = vperm.xlu0 %434, %v423
        %v436 = vpop.permute.xlu0 %435
        %v438 = vlaneseq
        %v439 = vshrl.u32 %v438, 7
        %v440 = vsub.s32 1, %v439
        %v441 = vrot.slane %v381, %v440
        %v442 = vmul.f32 %v436, %v441
        %v443 = vadd.f32 %v433, %v442
        %444 = vset.pattern.permute.xlu0 2
        %445 = vperm.xlu0 %444, %v423
        %v446 = vpop.permute.xlu0 %445
        %v448 = vlaneseq
        %v449 = vshrl.u32 %v448, 7
        %v450 = vsub.s32 2, %v449
        %v451 = vrot.slane %v381, %v450
        %v452 = vmul.f32 %v446, %v451
        %v453 = vadd.f32 %v443, %v452
        %454 = vset.pattern.permute.xlu0 3
        %455 = vperm.xlu0 %454, %v423
        %v456 = vpop.permute.xlu0 %455
        %v458 = vlaneseq
        %v459 = vshrl.u32 %v458, 7
        %v460 = vsub.s32 3, %v459
        %v461 = vrot.slane %v381, %v460
        %v462 = vmul.f32 %v456, %v461
        %v463 = vadd.f32 %v453, %v462
        %v464 = vadd.f32 %v422, %v463
        %v465 = vld [vmem:[%s4] sm:$0xf]
        %467 = vset.pattern.permute.xlu0 0
        %468 = vperm.xlu0 %467, %v465
        %v469 = vpop.permute.xlu0 %468
        %v471 = vadd.f32 %v464, %v469
        %v472 = vsub.f32 0.0, %v471
        %v473 = vmul.f32 %v472, 1.442695
        %v474 = vpow.pop %v473
        %v475 = vadd.f32 %v474, 1.0
        %v476 = vrcp.pop %v475
        %v477 = vmul.f32 1.0, %v476
        %v478 = vmul.f32 %v380, %v477
        %v479 = vsub.f32 1.0, %v477
        %v480 = vmul.f32 %v381, %v479
        %v481 = vld [vmem:[%s5] sm:$0xf]
        %483 = vset.pattern.permute.xlu0 0
        %484 = vperm.xlu0 %483, %v481
        %v485 = vpop.permute.xlu0 %484
        %v487 = vlaneseq
        %v488 = vshrl.u32 %v487, 7
        %v489 = vsub.s32 0, %v488
        %v490 = vrot.slane %v480, %v489
        %v491 = vmul.f32 %v485, %v490
        %492 = vset.pattern.permute.xlu0 1
        %493 = vperm.xlu0 %492, %v481
        %v494 = vpop.permute.xlu0 %493
        %v496 = vlaneseq
        %v497 = vshrl.u32 %v496, 7
        %v498 = vsub.s32 1, %v497
        %v499 = vrot.slane %v480, %v498
        %v500 = vmul.f32 %v494, %v499
        %v501 = vadd.f32 %v491, %v500
        %502 = vset.pattern.permute.xlu0 2
        %503 = vperm.xlu0 %502, %v481
        %v504 = vpop.permute.xlu0 %503
        %v506 = vlaneseq
        %v507 = vshrl.u32 %v506, 7
        %v508 = vsub.s32 2, %v507
        %v509 = vrot.slane %v480, %v508
        %v510 = vmul.f32 %v504, %v509
        %v511 = vadd.f32 %v501, %v510
        %512 = vset.pattern.permute.xlu0 3
        %513 = vperm.xlu0 %512, %v481
        %v514 = vpop.permute.xlu0 %513
        %v516 = vlaneseq
        %v517 = vshrl.u32 %v516, 7
        %v518 = vsub.s32 3, %v517
        %v519 = vrot.slane %v480, %v518
        %v520 = vmul.f32 %v514, %v519
        %v521 = vadd.f32 %v511, %v520
        %v522 = vld [vmem:[%s6] sm:$0xf]
        %524 = vset.pattern.permute.xlu0 0
        %525 = vperm.xlu0 %524, %v522
        %v526 = vpop.permute.xlu0 %525
        %v528 = vlaneseq
        %v529 = vshrl.u32 %v528, 7
        %v530 = vsub.s32 0, %v529
        %v531 = vrot.slane %v478, %v530
        %v532 = vmul.f32 %v526, %v531
        %533 = vset.pattern.permute.xlu0 1
        %534 = vperm.xlu0 %533, %v522
        %v535 = vpop.permute.xlu0 %534
        %v537 = vlaneseq
        %v538 = vshrl.u32 %v537, 7
        %v539 = vsub.s32 1, %v538
        %v540 = vrot.slane %v478, %v539
        %v541 = vmul.f32 %v535, %v540
        %v542 = vadd.f32 %v532, %v541
        %543 = vset.pattern.permute.xlu0 2
        %544 = vperm.xlu0 %543, %v522
        %v545 = vpop.permute.xlu0 %544
        %v547 = vlaneseq
        %v548 = vshrl.u32 %v547, 7
        %v549 = vsub.s32 2, %v548
        %v550 = vrot.slane %v478, %v549
        %v551 = vmul.f32 %v545, %v550
        %v552 = vadd.f32 %v542, %v551
        %553 = vset.pattern.permute.xlu0 3
        %554 = vperm.xlu0 %553, %v522
        %v555 = vpop.permute.xlu0 %554
        %v557 = vlaneseq
        %v558 = vshrl.u32 %v557, 7
        %v559 = vsub.s32 3, %v558
        %v560 = vrot.slane %v478, %v559
        %v561 = vmul.f32 %v555, %v560
        %v562 = vadd.f32 %v552, %v561
        %v563 = vadd.f32 %v521, %v562
        %v564 = vld [vmem:[%s7] sm:$0xf]
        %566 = vset.pattern.permute.xlu0 0
        %567 = vperm.xlu0 %566, %v564
        %v568 = vpop.permute.xlu0 %567
        %v570 = vadd.f32 %v563, %v568
        %571 = vst [vmem:[%s379] sm:$0xf] %v570
        %s572 = sand.u32 %s232, 1
        %s573 = scalar_lea.sflag [#allocation4], %s572
        %s574 = sand.u32 %s232, 1
        %s575 = smul.addr %s574, 4
        %s576 = scalar_lea.vmem [#allocation7], %s575
        // Predicated region
        $region61: #{tpu_custom_call.1} parent=51 // pred_check
          %p577 = pneg %p242
        $region62: #{tpu_custom_call.1} parent=51 // pred_check_branch
          %579 = sbr.rel (%p577) target = $region64
        $region63: #{tpu_custom_call.1} parent=51 // pred_region
          %s581 = ssub.s32 64, 64
          %582 = vsyncadd %s573, %s581
          %s583 = smul.addr %s32, 2
          %s584 = sadd.s32 %s33, %s583
          %s585 = smul.addr %s584, 64
          %s586 = scalar_lea.hbm %s8, %s585
          %s588 = sshll.u32 %s576, 4
          %s589 = int_to_ptr.vmem [resolvable:$true] %s588
          %591 = dma.vmem_to_hbm [thread:$0]  %s589, 64, %s586, %s573
        $region64: #{tpu_custom_call.1} parent=51 // pred_fallthru
          _
      $region52: #{tpu_custom_call.1} parent=5 // pred_fallthru
        _
      %p592 = scmp.le.s32.totalorder 2, %s23
      // Predicated region
      $region65: #{tpu_custom_call.1} parent=5 // pred_check
        %p593 = pneg %p592
      $region66: #{tpu_custom_call.1} parent=5 // pred_check_branch
        %595 = sbr.rel (%p593) target = $region68
      $region67: #{tpu_custom_call.1} parent=5 // pred_region
        %s596 = ssub.s32 %s23, 2
        // Predicated region
        $region69: #{tpu_custom_call.1} parent=67 // pred_check
          %p597 = pneg %p248
        $region70: #{tpu_custom_call.1} parent=67 // pred_check_branch
          %599 = sbr.rel (%p597) target = $region72
        $region71: #{tpu_custom_call.1} parent=67 // pred_region
          %s600 = sand.u32 %s233, 1
          %s601 = scalar_lea.sflag [#allocation4], %s600
          %s602 = sand.u32 %s233, 1
          %s603 = smul.addr %s602, 4
          %s604 = scalar_lea.vmem [#allocation7], %s603
          %605 = dma.done %s601, 64
        $region72: #{tpu_custom_call.1} parent=67 // pred_fallthru
          _
      $region68: #{tpu_custom_call.1} parent=5 // pred_fallthru
        _
    $region6: #{tpu_custom_call.1} parent=1 // loop_footer
      %s27 = sadd.s32 1, %s23
    $region7: #{tpu_custom_call.1} parent=1 // loop_footer_branch
      %22 = sbr.rel target = $region3
    $region8: #{tpu_custom_call.1} parent=1 // loop_exit
      _
    %606 = vsyncpa [#allocation3], 1
    %s607 = scalar_lea.sflag [#allocation3], 1
    %608 = vsyncpa %s607, 1
    %609 = vsyncpa [#allocation6], 1
    %s610 = scalar_lea.sflag [#allocation6], 1
    %611 = vsyncpa %s610, 1
    %612 = vsyncpa [#allocation4], 1
    %s613 = scalar_lea.sflag [#allocation4], 1
    %614 = vsyncpa %s613, 1

</llo_original>
